<compile_context>
chip_gen: v6e
topology: v6e:2x2x1
jax: 0.10.0
libtpu: 0.0.40
codegen_flags: <defaults>
</compile_context>

<pallas_src>
import functools

import jax
import jax.numpy as jnp
from jax.experimental import pallas as pl
from jax.experimental.pallas import tpu as pltpu


def _round_up(x: int, m: int) -> int:
    return ((x + m - 1) // m) * m


def _cdiv(a: int, b: int) -> int:
    return -(-a // b)


def _pred_from_embedding_kernel(logits_ref, label_ref, out_ref,
                                m_sc, num_sc, den_sc, *, C: int, BC: int):
    """One (bb, bc) tile of the online softmax-weighted label sum.

    (bb, 1) f32 scratch accumulators carry the running row max, the running
    numerator sum(exp * label) and denominator sum(exp) across grid axis 1."""
    c = pl.program_id(1)

    @pl.when(c == 0)
    def _():
        m_sc[...] = jnp.full(m_sc.shape, -jnp.inf, m_sc.dtype)
        num_sc[...] = jnp.zeros(num_sc.shape, num_sc.dtype)
        den_sc[...] = jnp.zeros(den_sc.shape, den_sc.dtype)

    x = logits_ref[...].astype(jnp.float32)      # (bb, bc) f32
    lab = label_ref[...]                         # native dtype; promoted in the product

    needs_col_mask = (C % BC) != 0               # static: only a ragged last class tile
    if needs_col_mask:
        col = jax.lax.broadcasted_iota(jnp.int32, x.shape, 1) + c * BC
        valid = col < C
        x = jnp.where(valid, x, -jnp.inf)

    m_prev = m_sc[...]
    m_new = jnp.maximum(m_prev, jnp.max(x, axis=1, keepdims=True))
    alpha = jnp.exp(m_prev - m_new)              # rescale factor for the running sums
    e = jnp.exp(x - m_new)                       # masked tail columns -> exp(-inf) = 0
    p = e * lab                                  # elementwise promotion of the label
    if needs_col_mask:
        p = jnp.where(valid, p, 0.0)             # guard against NaN/Inf garbage in padding
    den_sc[...] = alpha * den_sc[...] + jnp.sum(e, axis=1, keepdims=True)
    num_sc[...] = alpha * num_sc[...] + jnp.sum(p, axis=1, keepdims=True)
    m_sc[...] = m_new

    @pl.when(c == pl.num_programs(1) - 1)
    def _():
        # Exact division: HBM-bound kernel, matches the PyTorch reference closely.
        out_ref[...] = (num_sc[...] / den_sc[...]).astype(out_ref.dtype)


def _vmem_budget() -> tuple[int, int]:
    """(vmem_limit_bytes, block-sizing budget) derived from this chip's VMEM."""
    cap = 64 * 1024 * 1024                           # conservative fallback = v7x per-TC VMEM
    try:
        cap = int(getattr(pltpu.get_tpu_info(), "vmem_capacity_bytes", cap))
    except Exception:
        pass
    limit = min((cap * 3) // 4, 96 * 1024 * 1024)    # v7x: 48 MiB; v5e/v6e: 96 MiB
    budget = (limit * 3) // 4                        # headroom for temps / scratch / compiler
    return limit, budget


def _choose_blocks(B: int, C: int, itemsize_sum: int, max_itemsize: int, budget: int,
                   block_b: int | None, block_c: int | None) -> tuple[int, int]:
    C_pad = _round_up(C, 128)                        # physical lane footprint of a full-C row

    def rows_that_fit(fp_cols: int) -> int:
        # 2 input streams x 2 pipeline buffers (native dtype) + ~3 f32 full-width temporaries.
        per_row = 2 * fp_cols * itemsize_sum + 3 * fp_cols * 4
        return max(budget // per_row, 1)

    # ---- class-axis block --------------------------------------------------
    if block_c is not None:
        bc = C if block_c >= C else max(128, (block_c // 128) * 128)
    elif rows_that_fit(C_pad) >= min(256, _round_up(B, 8)):
        bc = C                                       # single reduction step over classes
    else:
        # vocab-scale C: tile the class axis so ~256 batch rows still fit the budget.
        bc = (budget // (256 * (2 * itemsize_sum + 12))) // 128 * 128
        bc = int(min(max(bc, 128), C_pad))
    fp_bc = C_pad if bc >= C else bc

    # ---- batch-axis block --------------------------------------------------
    if block_b is not None:
        bb = max(8, (block_b // 8) * 8)
    else:
        bb_budget = rows_that_fit(fp_bc)
        bb_target = max(8, (4 * 1024 * 1024) // (fp_bc * max_itemsize))  # ~4 MiB / input block
        bb = max(8, (min(bb_budget, bb_target) // 8) * 8)
    bb = min(bb, _round_up(B, 8))
    # v7x megacore: keep >= 2 batch grid steps so the "parallel" axis can use both TCs.
    if block_b is None and B >= 16 and bb >= B:
        bb = max(8, _round_up(_cdiv(B, 2), 8))
    return bb, bc


def pred_from_embedding(logits: jax.Array, label: jax.Array, *,
                        block_b: int | None = None,
                        block_c: int | None = None) -> jax.Array:
    """logits: (B, C), label: (B, C) -> (B,) float32 (softmax-weighted label sum)."""
    assert logits.shape == label.shape and logits.ndim == 2, "input tensor dimension is wrong"
    B, C = logits.shape
    itemsize_sum = logits.dtype.itemsize + label.dtype.itemsize
    max_itemsize = max(logits.dtype.itemsize, label.dtype.itemsize)

    vmem_limit, budget = _vmem_budget()
    bb, bc = _choose_blocks(B, C, itemsize_sum, max_itemsize, budget, block_b, block_c)
    nb, nc = _cdiv(B, bb), _cdiv(C, bc)

    cost = pl.CostEstimate(
        flops=6 * B * C,                 # max, sub, mul, 2 reductions, rescale (rough)
        transcendentals=B * C,           # exp
        bytes_accessed=B * C * itemsize_sum + B * 4,
    )

    kernel = functools.partial(_pred_from_embedding_kernel, C=C, BC=bc)

    out = pl.pallas_call(
        kernel,
        out_shape=jax.ShapeDtypeStruct((B, 1), jnp.float32),
        grid_spec=pltpu.PrefetchScalarGridSpec(
            num_scalar_prefetch=0,
            grid=(nb, nc),
            in_specs=[
                pl.BlockSpec((bb, bc), lambda i, c: (i, c)),
                pl.BlockSpec((bb, bc), lambda i, c: (i, c)),
            ],
            out_specs=pl.BlockSpec((bb, 1), lambda i, c: (i, 0)),
            scratch_shapes=[
                pltpu.VMEM((bb, 1), jnp.float32),   # running row max
                pltpu.VMEM((bb, 1), jnp.float32),   # running numerator
                pltpu.VMEM((bb, 1), jnp.float32),   # running denominator
            ],
        ),
        compiler_params=pltpu.CompilerParams(
            dimension_semantics=("parallel", "arbitrary"),
            vmem_limit_bytes=vmem_limit,
        ),
        cost_estimate=cost,
    )(logits, label)

    # Match PyTorch: output has shape (B,)
    return out[:, 0]


def _reference(logits, label):
    probs = jax.nn.softmax(logits.astype(jnp.float32), axis=1)
    return jnp.sum(probs * label.astype(jnp.float32), axis=1)


if __name__ == "__main__":
    key = jax.random.PRNGKey(0)
    k1, k2, k3, k4, k5, k6, k7, k8 = jax.random.split(key, 8)

    # Test 1: small shape matching the module's toy usage (batch=8, classes=32).
    B, C = 8, 32
    logits = jax.random.normal(k1, (B, C), dtype=jnp.float32)
    label = jax.nn.one_hot(jax.random.randint(k2, (B,), 0, C), C, dtype=jnp.float32)
    out = jax.block_until_ready(pred_from_embedding(logits, label))
    ref = _reference(logits, label)
    assert out.shape == (B,), f"bad output shape {out.shape}"
    assert jnp.allclose(out, ref, atol=1e-3, rtol=1e-3), "mismatch vs reference (f32)"

    # Test 2: bf16 streaming, ragged batch (no padding copy), multi-step batch grid.
    B2, C2 = 100, 256
    logits2 = jax.random.normal(k3, (B2, C2), dtype=jnp.float32).astype(jnp.bfloat16)
    label2 = jax.nn.one_hot(jax.random.randint(k4, (B2,), 0, C2), C2, dtype=jnp.bfloat16)
    out2 = jax.block_until_ready(pred_from_embedding(logits2, label2, block_b=32))
    ref2 = _reference(logits2, label2)
    assert out2.shape == (B2,), f"bad output shape {out2.shape}"
    assert jnp.allclose(out2, ref2, atol=2e-3, rtol=2e-3), "mismatch vs reference (bf16)"

    # Test 3: class-tiled online-softmax path with a ragged class tail (C=200, bc=128).
    B3, C3 = 64, 200
    logits3 = jax.random.normal(k5, (B3, C3), dtype=jnp.float32)
    label3 = jax.nn.one_hot(jax.random.randint(k6, (B3,), 0, C3), C3, dtype=jnp.float32)
    out3 = jax.block_until_ready(pred_from_embedding(logits3, label3, block_c=128))
    ref3 = _reference(logits3, label3)
    assert out3.shape == (B3,), f"bad output shape {out3.shape}"
    assert jnp.allclose(out3, ref3, atol=1e-3, rtol=1e-3), "mismatch vs reference (C-tiled)"

    # Test 4: auto block sizing with >=2 batch grid steps and a ragged batch tail.
    B4, C4 = 20, 64
    logits4 = jax.random.normal(k7, (B4, C4), dtype=jnp.float32)
    label4 = jax.random.uniform(k8, (B4, C4), dtype=jnp.float32)   # soft labels
    out4 = jax.block_until_ready(pred_from_embedding(logits4, label4))
    ref4 = _reference(logits4, label4)
    assert out4.shape == (B4,), f"bad output shape {out4.shape}"
    assert jnp.allclose(out4, ref4, atol=1e-3, rtol=1e-3), "mismatch vs reference (auto)"

    print("KERNEL_OK")
</pallas_src>

<mosaic_0001>
module attributes {stable_mosaic.version = 11 : i64} {
  func.func @_pred_from_embedding_kernel(%arg0: i32, %arg1: i32, %arg2: memref<8x32xf32, #tpu.memory_space<vmem>>, %arg3: memref<8x32xf32, #tpu.memory_space<vmem>>, %arg4: memref<8x1xf32, #tpu.memory_space<vmem>>, %arg5: memref<8x1xf32, #tpu.memory_space<vmem>>, %arg6: memref<8x1xf32, #tpu.memory_space<vmem>>, %arg7: memref<8x1xf32, #tpu.memory_space<vmem>>) attributes {dimension_semantics = [#tpu.dimension_semantics<parallel>, #tpu.dimension_semantics<arbitrary>], iteration_bounds = array<i64: 1, 1>, scalar_prefetch = 0 : i64, scratch_operands = 3 : i64, tpu.core_type = #tpu.core_type<tc>, window_params = [{transform_indices = @transform_0, window_bounds = array<i64: 8, 32>}, {transform_indices = @transform_1, window_bounds = array<i64: 8, 32>}, {transform_indices = @transform_2, window_bounds = array<i64: 8, 1>}]} {
    %c0_i32 = arith.constant 0 : i32
    %0 = arith.cmpi eq, %arg1, %c0_i32 : i32
    %1 = arith.extui %0 : i1 to i32
    %c0_i32_0 = arith.constant 0 : i32
    %2 = arith.cmpi ne, %1, %c0_i32_0 : i32
    scf.if %2 {
      %cst_20 = arith.constant 0xFF800000 : f32
      %31 = vector.broadcast %cst_20 : f32 to vector<8x1xf32>
      %c0_21 = arith.constant 0 : index
      %c0_22 = arith.constant 0 : index
      %32 = vector.load %arg5[%c0_21, %c0_22] : memref<8x1xf32, #tpu.memory_space<vmem>>, vector<8x1xf32>
      tpu.vector_store %arg5[%c0_21, %c0_22], %31 {strides = array<i32>} : memref<8x1xf32, #tpu.memory_space<vmem>>, vector<8x1xf32>,
      %cst_23 = arith.constant 0.000000e+00 : f32
      %33 = vector.broadcast %cst_23 : f32 to vector<8x1xf32>
      %c0_24 = arith.constant 0 : index
      %c0_25 = arith.constant 0 : index
      %34 = vector.load %arg6[%c0_24, %c0_25] : memref<8x1xf32, #tpu.memory_space<vmem>>, vector<8x1xf32>
      tpu.vector_store %arg6[%c0_24, %c0_25], %33 {strides = array<i32>} : memref<8x1xf32, #tpu.memory_space<vmem>>, vector<8x1xf32>,
      %cst_26 = arith.constant 0.000000e+00 : f32
      %35 = vector.broadcast %cst_26 : f32 to vector<8x1xf32>
      %c0_27 = arith.constant 0 : index
      %c0_28 = arith.constant 0 : index
      %36 = vector.load %arg7[%c0_27, %c0_28] : memref<8x1xf32, #tpu.memory_space<vmem>>, vector<8x1xf32>
      tpu.vector_store %arg7[%c0_27, %c0_28], %35 {strides = array<i32>} : memref<8x1xf32, #tpu.memory_space<vmem>>, vector<8x1xf32>,
    } else {
    }
    %c0 = arith.constant 0 : index
    %c0_1 = arith.constant 0 : index
    %3 = vector.load %arg2[%c0, %c0_1] : memref<8x32xf32, #tpu.memory_space<vmem>>, vector<8x32xf32>
    %c0_2 = arith.constant 0 : index
    %c0_3 = arith.constant 0 : index
    %4 = vector.load %arg3[%c0_2, %c0_3] : memref<8x32xf32, #tpu.memory_space<vmem>>, vector<8x32xf32>
    %c0_4 = arith.constant 0 : index
    %c0_5 = arith.constant 0 : index
    %5 = vector.load %arg5[%c0_4, %c0_5] : memref<8x1xf32, #tpu.memory_space<vmem>>, vector<8x1xf32>
    %cst = arith.constant dense<0xFF800000> : vector<8xf32>
    %6 = vector.multi_reduction <maximumf>, %3, %cst [1] : vector<8x32xf32> to vector<8xf32>
    %7 = vector.shape_cast %6 : vector<8xf32> to vector<8x1xf32>
    %8 = arith.maximumf %5, %7 : vector<8x1xf32>
    %9 = arith.subf %5, %8 : vector<8x1xf32>
    %10 = math.exp %9 : vector<8x1xf32>
    %11 = vector.broadcast %8 : vector<8x1xf32> to vector<8x32xf32>
    %12 = arith.subf %3, %11 : vector<8x32xf32>
    %13 = math.exp %12 : vector<8x32xf32>
    %14 = arith.mulf %13, %4 : vector<8x32xf32>
    %c0_6 = arith.constant 0 : index
    %c0_7 = arith.constant 0 : index
    %15 = vector.load %arg7[%c0_6, %c0_7] : memref<8x1xf32, #tpu.memory_space<vmem>>, vector<8x1xf32>
    %16 = arith.mulf %10, %15 : vector<8x1xf32>
    %cst_8 = arith.constant dense<0.000000e+00> : vector<8xf32>
    %17 = vector.multi_reduction <add>, %13, %cst_8 [1] : vector<8x32xf32> to vector<8xf32>
    %18 = vector.shape_cast %17 : vector<8xf32> to vector<8x1xf32>
    %19 = arith.addf %16, %18 : vector<8x1xf32>
    %c0_9 = arith.constant 0 : index
    %c0_10 = arith.constant 0 : index
    %20 = vector.load %arg7[%c0_9, %c0_10] : memref<8x1xf32, #tpu.memory_space<vmem>>, vector<8x1xf32>
    tpu.vector_store %arg7[%c0_9, %c0_10], %19 {strides = array<i32>} : memref<8x1xf32, #tpu.memory_space<vmem>>, vector<8x1xf32>,
    %c0_11 = arith.constant 0 : index
    %c0_12 = arith.constant 0 : index
    %21 = vector.load %arg6[%c0_11, %c0_12] : memref<8x1xf32, #tpu.memory_space<vmem>>, vector<8x1xf32>
    %22 = arith.mulf %10, %21 : vector<8x1xf32>
    %cst_13 = arith.constant dense<0.000000e+00> : vector<8xf32>
    %23 = vector.multi_reduction <add>, %14, %cst_13 [1] : vector<8x32xf32> to vector<8xf32>
    %24 = vector.shape_cast %23 : vector<8xf32> to vector<8x1xf32>
    %25 = arith.addf %22, %24 : vector<8x1xf32>
    %c0_14 = arith.constant 0 : index
    %c0_15 = arith.constant 0 : index
    %26 = vector.load %arg6[%c0_14, %c0_15] : memref<8x1xf32, #tpu.memory_space<vmem>>, vector<8x1xf32>
    tpu.vector_store %arg6[%c0_14, %c0_15], %25 {strides = array<i32>} : memref<8x1xf32, #tpu.memory_space<vmem>>, vector<8x1xf32>,
    %c0_16 = arith.constant 0 : index
    %c0_17 = arith.constant 0 : index
    %27 = vector.load %arg5[%c0_16, %c0_17] : memref<8x1xf32, #tpu.memory_space<vmem>>, vector<8x1xf32>
    tpu.vector_store %arg5[%c0_16, %c0_17], %8 {strides = array<i32>} : memref<8x1xf32, #tpu.memory_space<vmem>>, vector<8x1xf32>,
    %c0_i32_18 = arith.constant 0 : i32
    %28 = arith.cmpi eq, %arg1, %c0_i32_18 : i32
    %29 = arith.extui %28 : i1 to i32
    %c0_i32_19 = arith.constant 0 : i32
    %30 = arith.cmpi ne, %29, %c0_i32_19 : i32
    scf.if %30 {
      %c0_20 = arith.constant 0 : index
      %c0_21 = arith.constant 0 : index
      %31 = vector.load %arg6[%c0_20, %c0_21] : memref<8x1xf32, #tpu.memory_space<vmem>>, vector<8x1xf32>
      %c0_22 = arith.constant 0 : index
      %c0_23 = arith.constant 0 : index
      %32 = vector.load %arg7[%c0_22, %c0_23] : memref<8x1xf32, #tpu.memory_space<vmem>>, vector<8x1xf32>
      %33 = arith.divf %31, %32 : vector<8x1xf32>
      %c0_24 = arith.constant 0 : index
      %c0_25 = arith.constant 0 : index
      %34 = vector.load %arg4[%c0_24, %c0_25] : memref<8x1xf32, #tpu.memory_space<vmem>>, vector<8x1xf32>
      tpu.vector_store %arg4[%c0_24, %c0_25], %33 {strides = array<i32>} : memref<8x1xf32, #tpu.memory_space<vmem>>, vector<8x1xf32>,
    } else {
    }
    return
  }
  func.func @transform_0(%arg0: i32, %arg1: i32) -> (i32, i32) {
    %c0_i32 = arith.constant 0 : i32
    return %arg0, %arg1 : i32, i32
  }
  func.func @transform_1(%arg0: i32, %arg1: i32) -> (i32, i32) {
    %c0_i32 = arith.constant 0 : i32
    return %arg0, %arg1 : i32, i32
  }
  func.func @transform_2(%arg0: i32, %arg1: i32) -> (i32, i32) {
    %c0_i32 = arith.constant 0 : i32
    %c0_i32_0 = arith.constant 0 : i32
    return %arg0, %c0_i32 : i32, i32
  }
}

</mosaic_0001>

<llo_original>
// kernel: tpu_custom_call.1
$region0: #{tpu_custom_call.1}
  #allocation0 [shape = 'u32[]', space=smem, size = 0x4, offset = 0x4, fixed_abs, tag = 'smem constant byte address 0x4 - core index']
  #allocation1 [shape = 'u32[144,128]{1,0:T(1,128)}', space=vmem, size = 0x12000, scoped, tag = 'internal scratch']
  #allocation2 [shape = 'f32[8,1]{1,0:T(8,128)}', space=vmem, size = 0x1000, scoped, tag = 'scratch operand']
  #allocation3 [shape = 'f32[8,1]{1,0:T(8,128)}', space=vmem, size = 0x1000, scoped, tag = 'scratch operand']
  #allocation4 [shape = 'f32[8,1]{1,0:T(8,128)}', space=vmem, size = 0x1000, scoped, tag = 'scratch operand']
  %s0 = inlined_call_operand.hbm [shape: f32[8,32], index: 0, kind: input, shape index: {}]
  %s1 = inlined_call_operand.hbm [shape: f32[8,32], index: 1, kind: input, shape index: {}]
  %s2 = inlined_call_operand.vmem [shape: f32[8,1], index: 2, kind: output, shape index: {}]
  %s3 = sld [smem:[#allocation0]]
  $region34: #{tpu_custom_call.1} parent=0
    _
  %s5 = ssub.s32 1, %s3
  %s6 = scalar_select 0, %s5, %s3
  $region1: #{tpu_custom_call.1} parent=0
    #allocation5 [shape = 'u8[4096]{0}', space=vmem, size = 0x1000, scoped, tag = 'input window, operand 0, single buffered']
    #allocation6 [shape = 's32[1]{0}', space=sflag, size = 0x4, scoped, tag = 'scoped memory for tpu_custom_call.1']
    #allocation7 [shape = 'u8[4096]{0}', space=vmem, size = 0x1000, scoped, tag = 'input window, operand 1, single buffered']
    #allocation8 [shape = 's32[1]{0}', space=sflag, size = 0x4, scoped, tag = 'scoped memory for tpu_custom_call.1']
    %7 = vsyncpa [#allocation6], 0
    %8 = vsyncpa [#allocation8], 0
    // Predicated region
    $region2: #{tpu_custom_call.1} parent=1 // pred_check
      _
    $region3: #{tpu_custom_call.1} parent=1 // pred_check_branch
      %10 = sbr.rel (0) target = $region5
    $region4: #{tpu_custom_call.1} parent=1 // pred_region
      %s12 = ssub.s32 128, 128
      %13 = vsyncadd [#allocation6], %s12
      %s15 = sshll.u32 [#allocation5], 4
      %s16 = int_to_ptr.vmem [resolvable:$true] %s15
      %18 = dma.hbm_to_vmem [thread:$0]  %s0, 128, %s16, [#allocation6]
    $region5: #{tpu_custom_call.1} parent=1 // pred_fallthru
      _
    // Predicated region
    $region6: #{tpu_custom_call.1} parent=1 // pred_check
      _
    $region7: #{tpu_custom_call.1} parent=1 // pred_check_branch
      %20 = sbr.rel (0) target = $region9
    $region8: #{tpu_custom_call.1} parent=1 // pred_region
      %s22 = ssub.s32 128, 128
      %23 = vsyncadd [#allocation8], %s22
      %s25 = sshll.u32 [#allocation7], 4
      %s26 = int_to_ptr.vmem [resolvable:$true] %s25
      %28 = dma.hbm_to_vmem [thread:$0]  %s1, 128, %s26, [#allocation8]
    $region9: #{tpu_custom_call.1} parent=1 // pred_fallthru
      _
    // Predicated region
    $region10: #{tpu_custom_call.1} parent=1 // pred_check
      _
    $region11: #{tpu_custom_call.1} parent=1 // pred_check_branch
      %30 = sbr.rel (0) target = $region13
    $region12: #{tpu_custom_call.1} parent=1 // pred_region
      %31 = dma.done [#allocation6], 128
    $region13: #{tpu_custom_call.1} parent=1 // pred_fallthru
      _
    // Predicated region
    $region14: #{tpu_custom_call.1} parent=1 // pred_check
      _
    $region15: #{tpu_custom_call.1} parent=1 // pred_check_branch
      %33 = sbr.rel (0) target = $region17
    $region16: #{tpu_custom_call.1} parent=1 // pred_region
      %34 = dma.done [#allocation8], 128
    $region17: #{tpu_custom_call.1} parent=1 // pred_fallthru
      _
    %p35 = scmp.eq.s32.totalorder 0, 0
    // Predicated region
    $region18: #{tpu_custom_call.1} parent=1 // pred_check
      %p36 = pneg %p35
    $region19: #{tpu_custom_call.1} parent=1 // pred_check_branch
      %38 = sbr.rel (%p36) target = $region21
    $region20: #{tpu_custom_call.1} parent=1 // pred_region
      %vm39 = vcmask 7168
      %40 = vst.msk [vmem:[#allocation2] sm:$0xff] %vm39, -inf
      %41 = vst.msk [vmem:[#allocation3] sm:$0xff] %vm39, 0.0
      %42 = vst.msk [vmem:[#allocation4] sm:$0xff] %vm39, 0.0
    $region21: #{tpu_custom_call.1} parent=1 // pred_fallthru
      _
    %v43 = vld [vmem:[#allocation5] sm:$0xff]
    %v44 = vld [vmem:[#allocation7] sm:$0xff]
    %v45 = vld [vmem:[#allocation2] sm:$0xff]
    %vm46 = vcmask 261120
    %v47 = vsel %vm46, %v43, -inf
    %48 = vmax.xlane.f32.xlu0 %v47
    %v49 = vpop.xlane.xlu0 %48
    %v50 = vmax.f32 %v45, %v49
    %v51 = vsub.f32 %v45, %v50
    %v52 = vmul.f32 %v51, 1.442695
    %v53 = vpow.pop %v52
    %55 = vset.pattern.permute.xlu0 0
    %56 = vperm.xlu0 %55, %v50
    %v57 = vpop.permute.xlu0 %56
    %v59 = vsub.f32 %v43, %v57
    %v60 = vmul.f32 %v59, 1.442695
    %v61 = vpow.pop %v60
    %v62 = vmul.f32 %v61, %v44
    %v63 = vld [vmem:[#allocation4] sm:$0xff]
    %v64 = vmul.f32 %v53, %v63
    %v65 = vsel %vm46, %v61, 0.0
    %66 = vadd.xlane.f32.xlu0 %v65
    %v67 = vpop.xlane.xlu0 %66
    %v68 = vadd.f32 %v64, %v67
    %vm69 = vcmask 7168
    %70 = vst.msk [vmem:[#allocation4] sm:$0xff] %vm69, %v68
    %v71 = vld [vmem:[#allocation3] sm:$0xff]
    %v72 = vmul.f32 %v53, %v71
    %v73 = vsel %vm46, %v62, 0.0
    %74 = vadd.xlane.f32.xlu0 %v73
    %v75 = vpop.xlane.xlu0 %74
    %v76 = vadd.f32 %v72, %v75
    %77 = vst.msk [vmem:[#allocation3] sm:$0xff] %vm69, %v76
    %78 = vst.msk [vmem:[#allocation2] sm:$0xff] %vm69, %v50
    // Predicated region
    $region22: #{tpu_custom_call.1} parent=1 // pred_check
      %p79 = pneg %p35
    $region23: #{tpu_custom_call.1} parent=1 // pred_check_branch
      %81 = sbr.rel (%p79) target = $region25
    $region24: #{tpu_custom_call.1} parent=1 // pred_region
      %v82 = vld [vmem:[#allocation3] sm:$0xff]
      %v83 = vld [vmem:[#allocation4] sm:$0xff]
      %v84 = vrcp.pop %v83
      %v85 = vmul.f32 %v82, %v84
      %86 = vst.msk [vmem:[%s2] sm:$0xff] %vm69, %v85
    $region25: #{tpu_custom_call.1} parent=1 // pred_fallthru
      _
    // Predicated region
    $region26: #{tpu_custom_call.1} parent=1 // pred_check
      _
    $region27: #{tpu_custom_call.1} parent=1 // pred_check_branch
      %88 = sbr.rel (0) target = $region29
    $region28: #{tpu_custom_call.1} parent=1 // pred_region
      _
    $region29: #{tpu_custom_call.1} parent=1 // pred_fallthru
      _
    // Predicated region
    $region30: #{tpu_custom_call.1} parent=1 // pred_check
      _
    $region31: #{tpu_custom_call.1} parent=1 // pred_check_branch
      %90 = sbr.rel (0) target = $region33
    $region32: #{tpu_custom_call.1} parent=1 // pred_region
      _
    $region33: #{tpu_custom_call.1} parent=1 // pred_fallthru
      _
    %91 = vsyncpa [#allocation6], 1
    %92 = vsyncpa [#allocation8], 1

</llo_original>
